<compile_context>
chip_gen: v7x
topology: tpu7x:2x2x1
jax: 0.10.0
libtpu: 0.0.40
codegen_flags: <defaults>
</compile_context>

<pallas_src>
import functools

import jax
import jax.numpy as jnp
from jax.experimental import pallas as pl
from jax.experimental.pallas import tpu as pltpu


def _l2norm_rowwise_kernel(x_ref, o_ref):
    """fold == 1 path: one XLU lane-reduce per tile, single unmasked store."""
    xf = x_ref[...].astype(jnp.float32)
    ss = jnp.sum(xf * xf, axis=-1, keepdims=True)            # (R, 1)
    inv = pl.reciprocal(jnp.sqrt(ss) + 1e-10, approx=False)
    o_ref[...] = (xf * inv).astype(o_ref.dtype)               # multiply in f32, downcast once


def _l2norm_packed_kernel(x_ref, seg_ref, o_ref):
    """fold > 1 path: `fold` logical rows of width d packed into the lane axis.

    seg_ref is a (Dw, Dw) block-diagonal ones matrix.  One MXU matmul produces
    every group's sum-of-squares already broadcast to all lanes of that group,
    so the whole tile is normalized with one full-width multiply and a single
    unmasked store (no per-group XLU reduces, no vst.msk partial stores, no
    fold-way unrolled body).
    """
    xf = x_ref[...].astype(jnp.float32)
    x2 = xf * xf                                              # one full-tile pass
    ss = jnp.dot(x2, seg_ref[...], preferred_element_type=jnp.float32)  # (R, Dw)
    inv = pl.reciprocal(jnp.sqrt(ss) + 1e-10, approx=False)
    o_ref[...] = (xf * inv).astype(o_ref.dtype)


def _round_up(n, m):
    return ((n + m - 1) // m) * m


# Hard VMEM-safety cap on a single block's HBM footprint (double-buffered
# in + out = 4x this, i.e. <= 12 MiB -> fits v5e's 16 MiB scoped default with
# headroom for f32 intermediates; comfortable on v6e/v7x).
_MAX_BLOCK_BYTES = 3 * 1024 * 1024


def l2_normalize(x, block_rows=None, block_budget_bytes=2 * 1024 * 1024):
    """Row-wise L2 normalization, equivalent to the PyTorch L2Normalization."""
    if x.ndim != 2:
        raise ValueError(f"expected 2-D input (N, D), got {x.shape}")
    N, D = x.shape
    orig_N = N
    itemsize = x.dtype.itemsize

    # --- Lane-dense packing for small feature dims -------------------------
    fold = 1
    if 0 < D < 128 and 128 % D == 0:
        fold = 128 // D
        pad = (-N) % fold
        if pad:
            # Pad a handful of rows instead of falling back to lane-sparse
            # (masked vst.msk) blocks; padded rows normalize to 0 harmlessly.
            x = jnp.pad(x, ((0, pad), (0, 0)))
            N = N + pad
    xw = x.reshape(N // fold, fold * D)
    Nw, Dw = xw.shape

    # --- Dtype-aware, VMEM-capped row tiling --------------------------------
    if block_rows is None:
        br = max(1, block_budget_bytes // (Dw * itemsize))    # actual HBM bytes
    else:
        br = max(1, int(block_rows))
    br = min(br, max(1, _MAX_BLOCK_BYTES // (Dw * itemsize)))  # VMEM-safety cap
    # >= 4 grid steps when the row count allows (2 TCs on v7x x double-buffer).
    br = min(br, pl.cdiv(Nw, 4))
    sublane_mult = {4: 8, 2: 16, 1: 32}.get(itemsize, 8)
    br = _round_up(br, sublane_mult)
    if br >= Nw:
        br = Nw                       # full-extent block is always legal
    grid = (pl.cdiv(Nw, br),)         # ragged tail handled by output masking

    compiler_params = pltpu.CompilerParams(dimension_semantics=("parallel",))

    if fold == 1:
        out = pl.pallas_call(
            _l2norm_rowwise_kernel,
            out_shape=jax.ShapeDtypeStruct((Nw, Dw), x.dtype),
            grid_spec=pl.GridSpec(
                grid=grid,
                in_specs=[pl.BlockSpec((br, Dw), lambda i: (i, 0))],
                out_specs=pl.BlockSpec((br, Dw), lambda i: (i, 0)),
            ),
            compiler_params=compiler_params,
        )(xw)
    else:
        # Block-diagonal segment matrix: seg[i, j] = 1 iff i//D == j//D.
        g = jnp.arange(Dw, dtype=jnp.int32) // D
        seg = (g[:, None] == g[None, :]).astype(jnp.float32)  # (Dw, Dw), 64 KiB
        out = pl.pallas_call(
            _l2norm_packed_kernel,
            out_shape=jax.ShapeDtypeStruct((Nw, Dw), x.dtype),
            grid_spec=pl.GridSpec(
                grid=grid,
                in_specs=[
                    pl.BlockSpec((br, Dw), lambda i: (i, 0)),
                    pl.BlockSpec((Dw, Dw), lambda i: (0, 0)),  # resident constant
                ],
                out_specs=pl.BlockSpec((br, Dw), lambda i: (i, 0)),
            ),
            compiler_params=compiler_params,
        )(xw, seg)

    out = out.reshape(N, D)
    if N != orig_N:
        out = out[:orig_N]
    return out


if __name__ == "__main__":
    key = jax.random.PRNGKey(0)
    k1, k2, k3, k4, k5, k6 = jax.random.split(key, 6)

    def ref_l2norm(x):
        xf = x.astype(jnp.float32)
        div = jnp.sqrt(jnp.sum(xf * xf, axis=1, keepdims=True))
        return (xf / (div + 1e-10)).astype(x.dtype)

    cases = [
        # (name, input, block_rows, tolerance)
        # Module-sized case, D=32 < 128 -> MXU segmented-sum packed path.
        ("fold_d32", jax.random.normal(k1, (8, 32), jnp.float32), None, 1e-5),
        # Packed path with N not a multiple of the fold -> wrapper padding.
        ("fold_pad", jax.random.normal(k2, (10, 32), jnp.float32), None, 1e-5),
        # High fold (D=2 -> fold=64), previously a 64-way unrolled body.
        ("fold_d2", jax.random.normal(k3, (256, 2), jnp.float32), None, 1e-5),
        # Lane-dense fold=1 path, ragged row count, multi-step masked tail.
        ("ragged_n", jax.random.normal(k4, (100, 256), jnp.float32), 32, 1e-6),
        # D that neither reaches 128 nor divides it: full-extent lane block.
        ("d_odd", jax.random.normal(k5, (16, 48), jnp.float32), None, 1e-6),
        # bf16 input: f32 reduce + f32 scale multiply, single downcast, 4-step grid.
        ("bf16", jax.random.normal(k6, (64, 128), jnp.float32).astype(jnp.bfloat16), None, 3e-2),
    ]

    for name, x, br, tol in cases:
        out = jax.block_until_ready(l2_normalize(x, block_rows=br))
        ref = ref_l2norm(x)
        assert out.shape == x.shape and out.dtype == x.dtype, name
        ok = jnp.allclose(out.astype(jnp.float32), ref.astype(jnp.float32),
                          atol=tol, rtol=tol)
        assert ok, f"{name}: mismatch vs reference"

    print("KERNEL_OK")
</pallas_src>

<mosaic_0001>
module attributes {stable_mosaic.version = 11 : i64} {
  func.func @_l2norm_packed_kernel(%arg0: i32, %arg1: memref<2x128xf32, #tpu.memory_space<vmem>>, %arg2: memref<128x128xf32, #tpu.memory_space<vmem>>, %arg3: memref<2x128xf32, #tpu.memory_space<vmem>>) attributes {dimension_semantics = [#tpu.dimension_semantics<parallel>], iteration_bounds = array<i64: 1>, scalar_prefetch = 0 : i64, scratch_operands = 0 : i64, tpu.core_type = #tpu.core_type<tc>, window_params = [{transform_indices = @transform_0, window_bounds = array<i64: 2, 128>}, {pipeline_mode = #tpu.pipeline_mode<synchronous>, transform_indices = @transform_1, window_bounds = array<i64: 128, 128>}, {transform_indices = @transform_2, window_bounds = array<i64: 2, 128>}]} {
    %c0 = arith.constant 0 : index
    %c0_0 = arith.constant 0 : index
    %0 = vector.load %arg1[%c0, %c0_0] : memref<2x128xf32, #tpu.memory_space<vmem>>, vector<2x128xf32>
    %1 = arith.mulf %0, %0 : vector<2x128xf32>
    %c0_1 = arith.constant 0 : index
    %c0_2 = arith.constant 0 : index
    %2 = vector.load %arg2[%c0_1, %c0_2] : memref<128x128xf32, #tpu.memory_space<vmem>>, vector<128x128xf32>
    %cst = arith.constant dense<0.000000e+00> : vector<2x128xf32>
    %3 = tpu.matmul %1, %2, %cst {dimension_numbers = #tpu.dot_dimension_numbers<[1], [0], [0], [1], [0, 0, 1, 1], [], []>} : vector<2x128xf32>, vector<128x128xf32>, vector<2x128xf32> -> vector<2x128xf32>
    %4 = math.sqrt %3 : vector<2x128xf32>
    %cst_3 = arith.constant 1.000000e-10 : f32
    %5 = vector.broadcast %cst_3 : f32 to vector<2x128xf32>
    %6 = arith.addf %4, %5 : vector<2x128xf32>
    %7 = tpu.reciprocal %6 : vector<2x128xf32> -> vector<2x128xf32>
    %8 = arith.mulf %0, %7 : vector<2x128xf32>
    %c0_4 = arith.constant 0 : index
    %c0_5 = arith.constant 0 : index
    %9 = vector.load %arg3[%c0_4, %c0_5] : memref<2x128xf32, #tpu.memory_space<vmem>>, vector<2x128xf32>
    tpu.vector_store %arg3[%c0_4, %c0_5], %8 {strides = array<i32>} : memref<2x128xf32, #tpu.memory_space<vmem>>, vector<2x128xf32>,
    return
  }
  func.func @transform_0(%arg0: i32) -> (i32, i32) {
    %c0_i32 = arith.constant 0 : i32
    %c0_i32_0 = arith.constant 0 : i32
    return %arg0, %c0_i32 : i32, i32
  }
  func.func @transform_1(%arg0: i32) -> (i32, i32) {
    %c0_i32 = arith.constant 0 : i32
    %c0_i32_0 = arith.constant 0 : i32
    %c0_i32_1 = arith.constant 0 : i32
    return %c0_i32, %c0_i32_0 : i32, i32
  }
  func.func @transform_2(%arg0: i32) -> (i32, i32) {
    %c0_i32 = arith.constant 0 : i32
    %c0_i32_0 = arith.constant 0 : i32
    return %arg0, %c0_i32 : i32, i32
  }
}

</mosaic_0001>

<llo_original>
// kernel: tpu_custom_call.1
$region0: #{tpu_custom_call.1}
  #allocation0 [shape = 'u32[]', space=smem, size = 0x4, offset = 0x4, fixed_abs, tag = 'smem constant byte address 0x4 - core index']
  #allocation1 [shape = 'u32[144,128]{1,0:T(1,128)}', space=vmem, size = 0x12000, scoped, tag = 'internal scratch']
  %s0 = inlined_call_operand.hbm [shape: f32[2,128], index: 0, kind: input, shape index: {}]
  %s1 = inlined_call_operand.hbm [shape: f32[128,128], index: 1, kind: input, shape index: {}]
  %s2 = inlined_call_operand.hbm [shape: f32[2,128], index: 2, kind: output, shape index: {}]
  %s3 = sld [smem:[#allocation0]]
  $region26: #{tpu_custom_call.1} parent=0
    _
  %s5 = ssub.s32 1, %s3
  %s6 = scalar_select 0, %s5, %s3
  $region1: #{tpu_custom_call.1} parent=0
    #allocation2 [shape = 'u8[1024]{0}', space=vmem, size = 0x400, scoped, tag = 'input window, operand 0, single buffered']
    #allocation3 [shape = 's32[1]{0}', space=sflag, size = 0x4, scoped, tag = 'scoped memory for tpu_custom_call.1']
    #allocation4 [shape = 's32[1]{0}', space=sflag, size = 0x4, scoped, tag = 'scoped memory for tpu_custom_call.1']
    #allocation5 [shape = 'u8[65536]{0}', space=vmem, size = 0x10000, scoped, tag = 'input window, operand 1, single buffered']
    #allocation6 [shape = 's32[1]{0}', space=sflag, size = 0x4, scoped, tag = 'scoped memory for tpu_custom_call.1']
    #allocation7 [shape = 'u8[1024]{0}', space=vmem, size = 0x400, scoped, tag = 'output window, operand 0, single buffered']
    %7 = vsyncpa [#allocation3], 0
    %8 = vsyncpa [#allocation6], 0
    %9 = vsyncpa [#allocation4], 0
    // Predicated region
    $region2: #{tpu_custom_call.1} parent=1 // pred_check
      _
    $region3: #{tpu_custom_call.1} parent=1 // pred_check_branch
      %11 = sbr.rel (0) target = $region5
    $region4: #{tpu_custom_call.1} parent=1 // pred_region
      %s13 = ssub.s32 32, 32
      %14 = vsyncadd [#allocation3], %s13
      %s16 = sshll.u32 [#allocation2], 4
      %s17 = int_to_ptr.vmem [resolvable:$true] %s16
      %19 = dma.hbm_to_vmem [thread:$0]  %s0, 32, %s17, [#allocation3]
    $region5: #{tpu_custom_call.1} parent=1 // pred_fallthru
      _
    // Predicated region
    $region6: #{tpu_custom_call.1} parent=1 // pred_check
      _
    $region7: #{tpu_custom_call.1} parent=1 // pred_check_branch
      %21 = sbr.rel (0) target = $region9
    $region8: #{tpu_custom_call.1} parent=1 // pred_region
      %s23 = ssub.s32 2048, 2048
      %24 = vsyncadd [#allocation6], %s23
      %s25 = sshll.u32 [#allocation5], 4
      %s26 = int_to_ptr.vmem [resolvable:$true] %s25
      %31 = dma.hbm_to_vmem [thread:$0]  %s1, 2048, %s26, [#allocation6], 128, 128, 8
    $region9: #{tpu_custom_call.1} parent=1 // pred_fallthru
      _
    // Predicated region
    $region10: #{tpu_custom_call.1} parent=1 // pred_check
      _
    $region11: #{tpu_custom_call.1} parent=1 // pred_check_branch
      %33 = sbr.rel (0) target = $region13
    $region12: #{tpu_custom_call.1} parent=1 // pred_region
      %34 = dma.done [#allocation3], 32
    $region13: #{tpu_custom_call.1} parent=1 // pred_fallthru
      _
    // Predicated region
    $region14: #{tpu_custom_call.1} parent=1 // pred_check
      _
    $region15: #{tpu_custom_call.1} parent=1 // pred_check_branch
      %36 = sbr.rel (0) target = $region17
    $region16: #{tpu_custom_call.1} parent=1 // pred_region
      %37 = dma.done [#allocation6], 2048
    $region17: #{tpu_custom_call.1} parent=1 // pred_fallthru
      _
    %v38 = vld [vmem:[#allocation2] sm:$0x3]
    %v39 = vmul.f32 %v38, %v38
    %v40 = vld [vmem:[#allocation5] sm:$0xff]
    %v41 = vld [vmem:[#allocation5 + $0x8] sm:$0xff]
    %v42 = vld [vmem:[#allocation5 + $0x10] sm:$0xff]
    %v43 = vld [vmem:[#allocation5 + $0x18] sm:$0xff]
    %v44 = vld [vmem:[#allocation5 + $0x20] sm:$0xff]
    %v45 = vld [vmem:[#allocation5 + $0x28] sm:$0xff]
    %v46 = vld [vmem:[#allocation5 + $0x30] sm:$0xff]
    %v47 = vld [vmem:[#allocation5 + $0x38] sm:$0xff]
    %v48 = vld [vmem:[#allocation5 + $0x40] sm:$0xff]
    %v49 = vld [vmem:[#allocation5 + $0x48] sm:$0xff]
    %v50 = vld [vmem:[#allocation5 + $0x50] sm:$0xff]
    %v51 = vld [vmem:[#allocation5 + $0x58] sm:$0xff]
    %v52 = vld [vmem:[#allocation5 + $0x60] sm:$0xff]
    %v53 = vld [vmem:[#allocation5 + $0x68] sm:$0xff]
    %v54 = vld [vmem:[#allocation5 + $0x70] sm:$0xff]
    %v55 = vld [vmem:[#allocation5 + $0x78] sm:$0xff]
    %56 = vmatprep.subr.mxu0 0.0
    %57 = vmatpush1.msra.mxu0 %v40
    %58 = vmatprep.subr.mxu0 0.0
    %59 = vmatpush1.msra.mxu0 %v41
    %60 = vmatprep.subr.mxu0 0.0
    %61 = vmatpush1.msra.mxu0 %v42
    %62 = vmatprep.subr.mxu0 0.0
    %63 = vmatpush1.msra.mxu0 %v43
    %64 = vmatprep.subr.mxu0 0.0
    %65 = vmatpush1.msra.mxu0 %v44
    %66 = vmatprep.subr.mxu0 0.0
    %67 = vmatpush1.msra.mxu0 %v45
    %68 = vmatprep.subr.mxu0 0.0
    %69 = vmatpush1.msra.mxu0 %v46
    %70 = vmatprep.subr.mxu0 0.0
    %71 = vmatpush1.msra.mxu0 %v47
    %72 = vmatprep.subr.mxu0 0.0
    %73 = vmatpush1.msra.mxu0 %v48
    %74 = vmatprep.subr.mxu0 0.0
    %75 = vmatpush1.msra.mxu0 %v49
    %76 = vmatprep.subr.mxu0 0.0
    %77 = vmatpush1.msra.mxu0 %v50
    %78 = vmatprep.subr.mxu0 0.0
    %79 = vmatpush1.msra.mxu0 %v51
    %80 = vmatprep.subr.mxu0 0.0
    %81 = vmatpush1.msra.mxu0 %v52
    %82 = vmatprep.subr.mxu0 0.0
    %83 = vmatpush1.msra.mxu0 %v53
    %84 = vmatprep.subr.mxu0 0.0
    %85 = vmatpush1.msra.mxu0 %v54
    %86 = vmatprep.subr.mxu0 0.0
    %87 = vmatpush1.msra.mxu0 %v55
    %88 = vmatprep.subr.mxu0 0.0
    %89 = vmatpush1.msra.mxu0 0.0
    %90 = vmatprep.subr.mxu0 0.0
    %91 = vmatpush1.msra.mxu0 0.0
    %92 = vmatprep.subr.mxu0 0.0
    %93 = vmatpush1.msra.mxu0 0.0
    %94 = vmatprep.subr.mxu0 0.0
    %95 = vmatpush1.msra.mxu0 0.0
    %96 = vmatprep.subr.mxu0 0.0
    %97 = vmatpush1.msra.mxu0 0.0
    %98 = vmatprep.subr.mxu0 0.0
    %99 = vmatpush1.msra.mxu0 0.0
    %100 = vmatprep.subr.mxu0 0.0
    %101 = vmatpush1.msra.mxu0 0.0
    %102 = vmatprep.subr.mxu0 0.0
    %103 = vmatpush1.msra.mxu0 0.0
    %104 = vmatprep.subr.mxu0 0.0
    %105 = vmatpush1.msra.mxu0 0.0
    %106 = vmatprep.subr.mxu0 0.0
    %107 = vmatpush1.msra.mxu0 0.0
    %108 = vmatprep.subr.mxu0 0.0
    %109 = vmatpush1.msra.mxu0 0.0
    %110 = vmatprep.subr.mxu0 0.0
    %111 = vmatpush1.msra.mxu0 0.0
    %112 = vmatprep.subr.mxu0 0.0
    %113 = vmatpush1.msra.mxu0 0.0
    %114 = vmatprep.subr.mxu0 0.0
    %115 = vmatpush1.msra.mxu0 0.0
    %116 = vmatprep.subr.mxu0 0.0
    %117 = vmatpush1.msra.mxu0 0.0
    %118 = vmatprep.subr.mxu0 0.0
    %119 = vmatpush1.msra.mxu0 0.0
    %120 = vmatprep.mubr.f32.mxu0 0.0
    %121 = vmatmul.mubr.f32.gmra.mrb[0].mxu0 %v39
    %v122 = vpop.f32.mrb[0].mxu0
    %v123 = vadd.f32 0.0, %v122
    %v124 = vpop.f32.mrb[0].mxu0
    %125 = vdwg.mxu0
    %v126 = vrsqrt.pop %v123
    %v127 = vmul.f32 %v123, %v126
    %vm128 = vcmp.eq.f32.partialorder %v123, inf
    %v129 = vsel %vm128, %v123, %v127
    %vm130 = vcmp.eq.f32.partialorder %v123, 0.0
    %v131 = vand.u32 %v123, 2147483648
    %v132 = vsel %vm130, %v131, %v129
    %v133 = vadd.f32 %v132, 1e-10
    %v134 = vrcp.pop %v133
    %v135 = vmul.f32 %v38, %v134
    %136 = vst [vmem:[#allocation7] sm:$0x3] %v135
    // Predicated region
    $region18: #{tpu_custom_call.1} parent=1 // pred_check
      _
    $region19: #{tpu_custom_call.1} parent=1 // pred_check_branch
      %138 = sbr.rel (0) target = $region21
    $region20: #{tpu_custom_call.1} parent=1 // pred_region
      %s140 = ssub.s32 32, 32
      %141 = vsyncadd [#allocation4], %s140
      %s143 = sshll.u32 [#allocation7], 4
      %s144 = int_to_ptr.vmem [resolvable:$true] %s143
      %146 = dma.vmem_to_hbm [thread:$0]  %s144, 32, %s2, [#allocation4]
    $region21: #{tpu_custom_call.1} parent=1 // pred_fallthru
      _
    // Predicated region
    $region22: #{tpu_custom_call.1} parent=1 // pred_check
      _
    $region23: #{tpu_custom_call.1} parent=1 // pred_check_branch
      %148 = sbr.rel (0) target = $region25
    $region24: #{tpu_custom_call.1} parent=1 // pred_region
      %149 = dma.done [#allocation4], 32
    $region25: #{tpu_custom_call.1} parent=1 // pred_fallthru
      _
    %150 = vsyncpa [#allocation3], 1
    %151 = vsyncpa [#allocation6], 1
    %152 = vsyncpa [#allocation4], 1

</llo_original>
